<compile_context>
chip_gen: v7x
topology: tpu7x:2x2x1
jax: 0.10.0
libtpu: 0.0.40
codegen_flags: <defaults>
</compile_context>

<pallas_src>
import functools

import numpy as np
import jax
import jax.numpy as jnp
from jax.experimental import pallas as pl
from jax.experimental.pallas import tpu as pltpu


def _round_up(v, m):
    return ((v + m - 1) // m) * m


def _stft_mag_kernel(frames_ref, basis_ref, out_ref, *, kp):
    # frames_ref: (TM, L)  f32
    # basis_ref : (L, 2*kp) f32  -- cols [0:K) windowed cos, [kp:kp+K) windowed -sin
    # out_ref   : (TM, kp) f32  -- lane-dense, junk in cols >= K (sliced outside)
    y = jnp.dot(frames_ref[...], basis_ref[...],
                preferred_element_type=jnp.float32)            # single MXU pass set
    re = y[:, :kp]
    im = y[:, kp:]
    out_ref[...] = jnp.sqrt(re * re + im * im + 1e-8)


@functools.partial(jax.jit, static_argnames=("sample_rate", "frame_len", "fps"))
def stft_layer(x, *, sample_rate, frame_len, fps):
    """Pallas equivalent of STFTLayer.forward: (B, T) -> (B, n_frames, n_freq)."""
    hop = sample_rate // fps
    B, T = x.shape
    L = frame_len
    K = L // 2 + 1
    F = 1 + (T - L) // hop

    KP = _round_up(K, 128)      # lane-dense half-width (128 for K=33)
    TM = 256                    # row tile (sweepable 256-512)

    # ---- trace-time constants: fused, window-folded real-DFT basis ----
    n = np.arange(L, dtype=np.float64)
    if L > 1:
        win = 0.5 * (1.0 - np.cos(2.0 * np.pi * n / (L - 1)))   # periodic=False Hann
    else:
        win = np.ones((1,), dtype=np.float64)
    k = np.arange(K, dtype=np.float64)
    ang = 2.0 * np.pi * np.outer(n, k) / L                       # (L, K)
    basis_np = np.zeros((L, 2 * KP), dtype=np.float32)
    basis_np[:, :K] = (win[:, None] * np.cos(ang)).astype(np.float32)
    basis_np[:, KP:KP + K] = (win[:, None] * (-np.sin(ang))).astype(np.float32)
    basis = jnp.asarray(basis_np)

    # ---- frame extraction via static strided slices (no gather kernel) ----
    nj = -(-L // hop)                       # pieces per frame (ceil(L / hop))
    rows = F - 1 + nj
    t_need = rows * hop
    xp = jnp.pad(x, ((0, 0), (0, t_need - T))) if t_need > T else x
    xr = xp[:, :t_need].reshape(B, rows, hop)
    pieces = []
    for j in range(nj):
        w_j = min(hop, L - j * hop)
        pieces.append(xr[:, j:j + F, :w_j])
    frames = jnp.concatenate(pieces, axis=-1).astype(jnp.float32)    # (B, F, L)

    # ---- pad rows to a multiple of the row tile ----
    M = B * F
    M_pad = _round_up(M, TM)
    frames = frames.reshape(M, L)
    frames_p = jnp.pad(frames, ((0, M_pad - M), (0, 0)))

    out_p = pl.pallas_call(
        functools.partial(_stft_mag_kernel, kp=KP),
        out_shape=jax.ShapeDtypeStruct((M_pad, KP), jnp.float32),
        grid_spec=pltpu.PrefetchScalarGridSpec(
            num_scalar_prefetch=0,
            grid=(M_pad // TM,),
            in_specs=[
                pl.BlockSpec((TM, L), lambda i: (i, 0)),       # frame tile
                pl.BlockSpec((L, 2 * KP), lambda i: (0, 0)),   # fused basis (resident)
            ],
            out_specs=pl.BlockSpec((TM, KP), lambda i: (i, 0)),  # lane-dense tile
        ),
        compiler_params=pltpu.CompilerParams(
            dimension_semantics=("parallel",),
        ),
    )(frames_p, basis)

    return out_p[:M, :K].reshape(B, F, K)


def _reference(x, *, sample_rate, frame_len, fps):
    # Pure-jnp reference mirroring torch.stft(center=False, periodic=False window)
    # + sqrt(re^2 + im^2 + 1e-8).
    hop = sample_rate // fps
    B, T = x.shape
    L = frame_len
    K = L // 2 + 1
    F = 1 + (T - L) // hop
    idx = (jnp.arange(F) * hop)[:, None] + jnp.arange(L)[None, :]
    frames = x[:, idx].astype(jnp.float32)                    # (B, F, L)
    n = jnp.arange(L, dtype=jnp.float32)
    win = 0.5 * (1.0 - jnp.cos(2.0 * jnp.pi * n / (L - 1)))
    fw = frames * win[None, None, :]
    k = jnp.arange(K, dtype=jnp.float32)
    ang = 2.0 * jnp.pi * n[:, None] * k[None, :] / L
    re = jnp.einsum("bfl,lk->bfk", fw, jnp.cos(ang))
    im = jnp.einsum("bfl,lk->bfk", fw, -jnp.sin(ang))
    return jnp.sqrt(re * re + im * im + 1e-8)


if __name__ == "__main__":
    # hop = 160 // 10 = 16 ; F = 1 + (2048 - 64) // 16 = 125 ; K = 33
    sample_rate, frame_len, fps = 160, 64, 10
    B, T = 4, 2048

    key = jax.random.PRNGKey(0)
    x = jax.random.normal(key, (B, T), dtype=jnp.float32)

    out = stft_layer(x, sample_rate=sample_rate, frame_len=frame_len, fps=fps)
    out = jax.block_until_ready(out)

    ref = _reference(x, sample_rate=sample_rate, frame_len=frame_len, fps=fps)
    F = 1 + (T - frame_len) // (sample_rate // fps)
    assert out.shape == (B, F, frame_len // 2 + 1), out.shape
    err = float(jnp.max(jnp.abs(out - ref)))
    assert jnp.allclose(out, ref, rtol=2e-4, atol=2e-4), err

    print("KERNEL_OK")
</pallas_src>

<mosaic_0001>
module attributes {stable_mosaic.version = 11 : i64} {
  func.func @_stft_mag_kernel(%arg0: i32, %arg1: memref<256x64xf32, #tpu.memory_space<vmem>>, %arg2: memref<64x256xf32, #tpu.memory_space<vmem>>, %arg3: memref<256x128xf32, #tpu.memory_space<vmem>>) attributes {dimension_semantics = [#tpu.dimension_semantics<parallel>], iteration_bounds = array<i64: 2>, scalar_prefetch = 0 : i64, scratch_operands = 0 : i64, tpu.core_type = #tpu.core_type<tc>, window_params = [{transform_indices = @transform_0, window_bounds = array<i64: 256, 64>}, {pipeline_mode = #tpu.pipeline_mode<synchronous>, transform_indices = @transform_1, window_bounds = array<i64: 64, 256>}, {transform_indices = @transform_2, window_bounds = array<i64: 256, 128>}]} {
    %c0 = arith.constant 0 : index
    %c0_0 = arith.constant 0 : index
    %0 = vector.load %arg1[%c0, %c0_0] : memref<256x64xf32, #tpu.memory_space<vmem>>, vector<256x64xf32>
    %c0_1 = arith.constant 0 : index
    %c0_2 = arith.constant 0 : index
    %1 = vector.load %arg2[%c0_1, %c0_2] : memref<64x256xf32, #tpu.memory_space<vmem>>, vector<64x256xf32>
    %cst = arith.constant dense<0.000000e+00> : vector<256x256xf32>
    %2 = tpu.matmul %0, %1, %cst {dimension_numbers = #tpu.dot_dimension_numbers<[1], [0], [0], [1], [0, 0, 1, 1], [], []>} : vector<256x64xf32>, vector<64x256xf32>, vector<256x256xf32> -> vector<256x256xf32>
    %3 = vector.extract_strided_slice %2 {offsets = [0, 0], sizes = [256, 128], strides = [1, 1]} : vector<256x256xf32> to vector<256x128xf32>
    %4 = vector.extract_strided_slice %2 {offsets = [0, 128], sizes = [256, 128], strides = [1, 1]} : vector<256x256xf32> to vector<256x128xf32>
    %5 = arith.mulf %3, %3 : vector<256x128xf32>
    %6 = arith.mulf %4, %4 : vector<256x128xf32>
    %7 = arith.addf %5, %6 : vector<256x128xf32>
    %cst_3 = arith.constant 9.99999993E-9 : f32
    %8 = vector.broadcast %cst_3 : f32 to vector<256x128xf32>
    %9 = arith.addf %7, %8 : vector<256x128xf32>
    %10 = math.sqrt %9 : vector<256x128xf32>
    %c0_4 = arith.constant 0 : index
    %c0_5 = arith.constant 0 : index
    %11 = vector.load %arg3[%c0_4, %c0_5] : memref<256x128xf32, #tpu.memory_space<vmem>>, vector<256x128xf32>
    tpu.vector_store %arg3[%c0_4, %c0_5], %10 {strides = array<i32>} : memref<256x128xf32, #tpu.memory_space<vmem>>, vector<256x128xf32>,
    return
  }
  func.func @transform_0(%arg0: i32) -> (i32, i32) {
    %c0_i32 = arith.constant 0 : i32
    %c0_i32_0 = arith.constant 0 : i32
    return %arg0, %c0_i32 : i32, i32
  }
  func.func @transform_1(%arg0: i32) -> (i32, i32) {
    %c0_i32 = arith.constant 0 : i32
    %c0_i32_0 = arith.constant 0 : i32
    %c0_i32_1 = arith.constant 0 : i32
    return %c0_i32, %c0_i32_0 : i32, i32
  }
  func.func @transform_2(%arg0: i32) -> (i32, i32) {
    %c0_i32 = arith.constant 0 : i32
    %c0_i32_0 = arith.constant 0 : i32
    return %arg0, %c0_i32 : i32, i32
  }
}

</mosaic_0001>

<llo_original>
// kernel: stft_layer.1
$region0: #{stft_layer.1}
  #allocation0 [shape = 'u32[]', space=smem, size = 0x4, offset = 0x4, fixed_abs, tag = 'smem constant byte address 0x4 - core index']
  #allocation1 [shape = 'u32[144,128]{1,0:T(1,128)}', space=vmem, size = 0x12000, scoped, tag = 'internal scratch']
  %s0 = inlined_call_operand.vmem [shape: f32[512,64], index: 0, kind: input, shape index: {}]
  %s1 = inlined_call_operand.vmem [shape: f32[64,256], index: 1, kind: input, shape index: {}]
  %s2 = inlined_call_operand.vmem [shape: f32[512,128], index: 2, kind: output, shape index: {}]
  %s3 = sld [smem:[#allocation0]]
  $region41: #{stft_layer.1} parent=0
    _
  %s5 = ssub.s32 1, %s3
  %s6 = scalar_select 0, %s5, %s3
  loop: start=0, step=1, limit=4
  $region2: #{stft_layer.1} parent=0 // loop_pre_header
    _
  $region3: #{stft_layer.1} parent=0 // loop_header
    %s8 = sphi 0, %s12
    %p9 = scmp.ge.s32.totalorder %s8, 4
    %s18 = sphi 0, %s20
    %s21 = sphi 0, %s18
    %s22 = sphi 0, %s21
    %s38 = sphi 0, %s22
    %s42 = sphi 0, %s42
    %s44 = sphi 0, %s42
    %s45 = sphi 0, %s44
    %s59 = sphi 0, %s45
    %s65 = sphi 0, %s67
    %s68 = sphi 0, %s65
    %s69 = sphi 0, %s68
    %s85 = sphi 0, %s69
  $region4: #{stft_layer.1} parent=0 // loop_header_branch
    %11 = sbr.rel (%p9) target = $region8
  $region5: #{stft_layer.1} parent=0 // loop_body
    %s13 = ssub.s32 %s8, 1
    %s14 = ssub.s32 %s8, 2
    %s15 = sadd.s32 %s8, 1
    %s16 = ssub.s32 %s8, %s15
    %p17 = scmp.eq.s32.totalorder %s16, 0
    %s19 = sadd.s32 %s18, 1
    %s20 = scalar_select %p17, %s18, %s19
    %p23 = pneg %p17
    %p24 = scmp.eq.s32.totalorder %s8, 1
    %p25 = por %p23, %p24
    %p26 = scmp.ne.s32.totalorder %s18, %s21
    %p27 = scmp.eq.s32.totalorder %s8, 0
    %p28 = por %p26, %p27
    %p29 = scmp.ne.s32.totalorder %s18, %s21
    %p30 = scmp.eq.s32.totalorder %s13, 1
    %p31 = por %p29, %p30
    %p32 = scmp.ne.s32.totalorder %s21, %s22
    %p33 = scmp.eq.s32.totalorder %s13, 0
    %p34 = por %p32, %p33
    %p35 = scmp.ne.s32.totalorder %s21, %s22
    %p36 = scmp.eq.s32.totalorder %s14, 1
    %p37 = por %p35, %p36
    %p39 = scmp.ne.s32.totalorder %s22, %s38
    %p40 = scmp.eq.s32.totalorder %s14, 0
    %p41 = por %p39, %p40
    %s43 = sadd.s32 %s42, 1
    %p46 = scmp.eq.s32.totalorder %s8, 1
    %p47 = scmp.ne.s32.totalorder %s42, %s44
    %p48 = scmp.eq.s32.totalorder %s8, 0
    %p49 = por %p47, %p48
    %p50 = scmp.ne.s32.totalorder %s42, %s44
    %p51 = scmp.eq.s32.totalorder %s13, 1
    %p52 = por %p50, %p51
    %p53 = scmp.ne.s32.totalorder %s44, %s45
    %p54 = scmp.eq.s32.totalorder %s13, 0
    %p55 = por %p53, %p54
    %p56 = scmp.ne.s32.totalorder %s44, %s45
    %p57 = scmp.eq.s32.totalorder %s14, 1
    %p58 = por %p56, %p57
    %p60 = scmp.ne.s32.totalorder %s45, %s59
    %p61 = scmp.eq.s32.totalorder %s14, 0
    %p62 = por %p60, %p61
    %s63 = ssub.s32 %s8, %s15
    %p64 = scmp.eq.s32.totalorder %s63, 0
    %s66 = sadd.s32 %s65, 1
    %s67 = scalar_select %p64, %s65, %s66
    %p70 = pneg %p64
    %p71 = scmp.eq.s32.totalorder %s8, 1
    %p72 = por %p70, %p71
    %p73 = scmp.ne.s32.totalorder %s65, %s68
    %p74 = scmp.eq.s32.totalorder %s8, 0
    %p75 = por %p73, %p74
    %p76 = scmp.ne.s32.totalorder %s65, %s68
    %p77 = scmp.eq.s32.totalorder %s13, 1
    %p78 = por %p76, %p77
    %p79 = scmp.ne.s32.totalorder %s68, %s69
    %p80 = scmp.eq.s32.totalorder %s13, 0
    %p81 = por %p79, %p80
    %p82 = scmp.ne.s32.totalorder %s68, %s69
    %p83 = scmp.eq.s32.totalorder %s14, 1
    %p84 = por %p82, %p83
    %p86 = scmp.ne.s32.totalorder %s69, %s85
    %p87 = scmp.eq.s32.totalorder %s14, 0
    %p88 = por %p86, %p87
    %p89 = scmp.le.s32.totalorder 1, %s8
    %p90 = scmp.lt.s32.totalorder %s8, 3
    %p91 = pnand %p89, %p90
    %p92 = pneg %p91
    // Predicated region
    $region9: #{stft_layer.1} parent=5 // pred_check
      _
    $region10: #{stft_layer.1} parent=5 // pred_check_branch
      %94 = sbr.rel (%p91) target = $region12
    $region11: #{stft_layer.1} parent=5 // pred_region
      %s95 = ssub.s32 %s8, 1
      // Predicated region
      $region13: #{stft_layer.1} parent=11 // pred_check
        %p96 = pneg %p55
      $region14: #{stft_layer.1} parent=11 // pred_check_branch
        %98 = sbr.rel (%p96) target = $region16
      $region15: #{stft_layer.1} parent=11 // pred_region
        _
      $region16: #{stft_layer.1} parent=11 // pred_fallthru
        _
    $region12: #{stft_layer.1} parent=5 // pred_fallthru
      _
    %p99 = scmp.lt.s32.totalorder %s8, 2
    // Predicated region
    $region17: #{stft_layer.1} parent=5 // pred_check
      %p100 = pneg %p99
    $region18: #{stft_layer.1} parent=5 // pred_check_branch
      %102 = sbr.rel (%p100) target = $region20
    $region19: #{stft_layer.1} parent=5 // pred_region
      // Predicated region
      $region21: #{stft_layer.1} parent=19 // pred_check
        %p103 = pneg %p28
      $region22: #{stft_layer.1} parent=19 // pred_check_branch
        %105 = sbr.rel (%p103) target = $region24
      $region23: #{stft_layer.1} parent=19 // pred_region
        %s106 = smul.u32 32, %s8
        %p107 = scmp.lt.s32.totalorder %s106, 63
        %s108 = scalar_select %p107, %s106, 63
        %s109 = smul.addr %s108, 8
        %s110 = scalar_lea.vmem %s0, %s109
        %s111 = smul.u32 32, %s8
      $region24: #{stft_layer.1} parent=19 // pred_fallthru
        _
    $region20: #{stft_layer.1} parent=5 // pred_fallthru
      _
    %p112 = scmp.le.s32.totalorder 1, %s8
    %p113 = scmp.lt.s32.totalorder %s8, 3
    %p114 = pnand %p112, %p113
    %p115 = pneg %p114
    // Predicated region
    $region25: #{stft_layer.1} parent=5 // pred_check
      _
    $region26: #{stft_layer.1} parent=5 // pred_check_branch
      %117 = sbr.rel (%p114) target = $region28
    $region27: #{stft_layer.1} parent=5 // pred_region
      %s118 = ssub.s32 %s8, 1
      %s119 = smul.u32 32, %s13
      %p120 = scmp.lt.s32.totalorder %s119, 63
      %s121 = scalar_select %p120, %s119, 63
      %s122 = smul.addr %s121, 8
      %s123 = scalar_lea.vmem %s0, %s122
      %p124 = pneg %p34
      %p125 = pneg %p31
      %p126 = pneg %p55
      %p127 = pneg %p52
      %p128 = pneg %p81
      %p129 = pneg %p78
      %s130 = smul.u32 32, %s13
      %p131 = scmp.lt.s32.totalorder %s130, 63
      %s132 = scalar_select %p131, %s130, 63
      %s133 = smul.addr %s132, 8
      %s134 = scalar_lea.vmem %s2, %s133
      %s135 = smul.u32 32, %s13
      %p136 = scmp.lt.s32.totalorder %s135, 63
      %s137 = scalar_select %p136, %s135, 63
      %s138 = smul.addr %s137, 8
      %s139 = scalar_lea.vmem %s0, %s138
      %s140 = smul.u32 32, %s13
      %s141 = smul.u32 32, %s13
      %p142 = scmp.lt.s32.totalorder %s141, 63
      %s143 = scalar_select %p142, %s141, 63
      %s144 = smul.addr %s143, 8
      %s145 = scalar_lea.vmem %s2, %s144
      %s146 = smul.u32 32, %s13
      %v147 = vld [vmem:[%s139] sm:$0xff]
      %v148 = vld [vmem:[%s139 + $0x8] sm:$0xff]
      %v149 = vld [vmem:[%s139 + $0x10] sm:$0xff]
      %v150 = vld [vmem:[%s139 + $0x18] sm:$0xff]
      %v151 = vld [vmem:[%s139 + $0x20] sm:$0xff]
      %v152 = vld [vmem:[%s139 + $0x28] sm:$0xff]
      %v153 = vld [vmem:[%s139 + $0x30] sm:$0xff]
      %v154 = vld [vmem:[%s139 + $0x38] sm:$0xff]
      %v155 = vld [vmem:[%s139 + $0x40] sm:$0xff]
      %v156 = vld [vmem:[%s139 + $0x48] sm:$0xff]
      %v157 = vld [vmem:[%s139 + $0x50] sm:$0xff]
      %v158 = vld [vmem:[%s139 + $0x58] sm:$0xff]
      %v159 = vld [vmem:[%s139 + $0x60] sm:$0xff]
      %v160 = vld [vmem:[%s139 + $0x68] sm:$0xff]
      %v161 = vld [vmem:[%s139 + $0x70] sm:$0xff]
      %v162 = vld [vmem:[%s139 + $0x78] sm:$0xff]
      %v163 = vld [vmem:[%s139 + $0x80] sm:$0xff]
      %v164 = vld [vmem:[%s139 + $0x88] sm:$0xff]
      %v165 = vld [vmem:[%s139 + $0x90] sm:$0xff]
      %v166 = vld [vmem:[%s139 + $0x98] sm:$0xff]
      %v167 = vld [vmem:[%s139 + $0xa0] sm:$0xff]
      %v168 = vld [vmem:[%s139 + $0xa8] sm:$0xff]
      %v169 = vld [vmem:[%s139 + $0xb0] sm:$0xff]
      %v170 = vld [vmem:[%s139 + $0xb8] sm:$0xff]
      %v171 = vld [vmem:[%s139 + $0xc0] sm:$0xff]
      %v172 = vld [vmem:[%s139 + $0xc8] sm:$0xff]
      %v173 = vld [vmem:[%s139 + $0xd0] sm:$0xff]
      %v174 = vld [vmem:[%s139 + $0xd8] sm:$0xff]
      %v175 = vld [vmem:[%s139 + $0xe0] sm:$0xff]
      %v176 = vld [vmem:[%s139 + $0xe8] sm:$0xff]
      %v177 = vld [vmem:[%s139 + $0xf0] sm:$0xff]
      %v178 = vld [vmem:[%s139 + $0xf8] sm:$0xff]
      %v179 = vld [vmem:[%s1] sm:$0xff]
      %v180 = vld [vmem:[%s1 + $0x8] sm:$0xff]
      %v181 = vld [vmem:[%s1 + $0x10] sm:$0xff]
      %v182 = vld [vmem:[%s1 + $0x18] sm:$0xff]
      %v183 = vld [vmem:[%s1 + $0x20] sm:$0xff]
      %v184 = vld [vmem:[%s1 + $0x28] sm:$0xff]
      %v185 = vld [vmem:[%s1 + $0x30] sm:$0xff]
      %v186 = vld [vmem:[%s1 + $0x38] sm:$0xff]
      %v187 = vld [vmem:[%s1 + $0x40] sm:$0xff]
      %v188 = vld [vmem:[%s1 + $0x48] sm:$0xff]
      %v189 = vld [vmem:[%s1 + $0x50] sm:$0xff]
      %v190 = vld [vmem:[%s1 + $0x58] sm:$0xff]
      %v191 = vld [vmem:[%s1 + $0x60] sm:$0xff]
      %v192 = vld [vmem:[%s1 + $0x68] sm:$0xff]
      %v193 = vld [vmem:[%s1 + $0x70] sm:$0xff]
      %v194 = vld [vmem:[%s1 + $0x78] sm:$0xff]
      %vm195 = vcmask 523264
      %v197 = vsel %vm195, %v147, 0
      %v200 = vsel %vm195, %v148, 0
      %v203 = vsel %vm195, %v149, 0
      %v206 = vsel %vm195, %v150, 0
      %v209 = vsel %vm195, %v151, 0
      %v212 = vsel %vm195, %v152, 0
      %v215 = vsel %vm195, %v153, 0
      %v218 = vsel %vm195, %v154, 0
      %v221 = vsel %vm195, %v155, 0
      %v224 = vsel %vm195, %v156, 0
      %v227 = vsel %vm195, %v157, 0
      %v230 = vsel %vm195, %v158, 0
      %v233 = vsel %vm195, %v159, 0
      %v236 = vsel %vm195, %v160, 0
      %v239 = vsel %vm195, %v161, 0
      %v242 = vsel %vm195, %v162, 0
      %v245 = vsel %vm195, %v163, 0
      %v248 = vsel %vm195, %v164, 0
      %v251 = vsel %vm195, %v165, 0
      %v254 = vsel %vm195, %v166, 0
      %v257 = vsel %vm195, %v167, 0
      %v260 = vsel %vm195, %v168, 0
      %v263 = vsel %vm195, %v169, 0
      %v266 = vsel %vm195, %v170, 0
      %v269 = vsel %vm195, %v171, 0
      %v272 = vsel %vm195, %v172, 0
      %v275 = vsel %vm195, %v173, 0
      %v278 = vsel %vm195, %v174, 0
      %v281 = vsel %vm195, %v175, 0
      %v284 = vsel %vm195, %v176, 0
      %v287 = vsel %vm195, %v177, 0
      %v290 = vsel %vm195, %v178, 0
      %292 = vmatprep.subr.mxu0 %v180
      %293 = vmatpush1.msra.mxu0 %v179
      %294 = vmatprep.subr.mxu0 %v182
      %295 = vmatpush1.msra.mxu0 %v181
      %296 = vmatprep.subr.mxu0 %v184
      %297 = vmatpush1.msra.mxu0 %v183
      %298 = vmatprep.subr.mxu0 %v186
      %299 = vmatpush1.msra.mxu0 %v185
      %300 = vmatprep.subr.mxu0 %v188
      %301 = vmatpush1.msra.mxu0 %v187
      %302 = vmatprep.subr.mxu0 %v190
      %303 = vmatpush1.msra.mxu0 %v189
      %304 = vmatprep.subr.mxu0 %v192
      %305 = vmatpush1.msra.mxu0 %v191
      %306 = vmatprep.subr.mxu0 %v194
      %307 = vmatpush1.msra.mxu0 %v193
      %308 = vmatprep.subr.mxu0 0.0
      %309 = vmatpush1.msra.mxu0 0.0
      %310 = vmatprep.subr.mxu0 0.0
      %311 = vmatpush1.msra.mxu0 0.0
      %312 = vmatprep.subr.mxu0 0.0
      %313 = vmatpush1.msra.mxu0 0.0
      %314 = vmatprep.subr.mxu0 0.0
      %315 = vmatpush1.msra.mxu0 0.0
      %316 = vmatprep.subr.mxu0 0.0
      %317 = vmatpush1.msra.mxu0 0.0
      %318 = vmatprep.subr.mxu0 0.0
      %319 = vmatpush1.msra.mxu0 0.0
      %320 = vmatprep.subr.mxu0 0.0
      %321 = vmatpush1.msra.mxu0 0.0
      %322 = vmatprep.subr.mxu0 0.0
      %323 = vmatpush1.msra.mxu0 0.0
      %324 = vmatprep.subr.mxu0 0.0
      %325 = vmatpush1.msra.mxu0 0.0
      %326 = vmatprep.subr.mxu0 0.0
      %327 = vmatpush1.msra.mxu0 0.0
      %328 = vmatprep.subr.mxu0 0.0
      %329 = vmatpush1.msra.mxu0 0.0
      %330 = vmatprep.subr.mxu0 0.0
      %331 = vmatpush1.msra.mxu0 0.0
      %332 = vmatprep.subr.mxu0 0.0
      %333 = vmatpush1.msra.mxu0 0.0
      %334 = vmatprep.subr.mxu0 0.0
      %335 = vmatpush1.msra.mxu0 0.0
      %336 = vmatprep.subr.mxu0 0.0
      %337 = vmatpush1.msra.mxu0 0.0
      %338 = vmatprep.subr.mxu0 0.0
      %339 = vmatpush1.msra.mxu0 0.0
      %340 = vmatprep.subr.mxu0 0.0
      %341 = vmatpush1.msra.mxu0 0.0
      %342 = vmatprep.subr.mxu0 0.0
      %343 = vmatpush1.msra.mxu0 0.0
      %344 = vmatprep.subr.mxu0 0.0
      %345 = vmatpush1.msra.mxu0 0.0
      %346 = vmatprep.subr.mxu0 0.0
      %347 = vmatpush1.msra.mxu0 0.0
      %348 = vmatprep.subr.mxu0 0.0
      %349 = vmatpush1.msra.mxu0 0.0
      %350 = vmatprep.subr.mxu0 0.0
      %351 = vmatpush1.msra.mxu0 0.0
      %352 = vmatprep.subr.mxu0 0.0
      %353 = vmatpush1.msra.mxu0 0.0
      %354 = vmatprep.subr.mxu0 0.0
      %355 = vmatpush1.msra.mxu0 0.0
      %356 = vmatprep.mubr.f32.mxu0 0.0
      %357 = vmatmul.mubr.f32.gmra.mrb[0].mxu0 %v197
      %v358 = vpop.f32.mrb[0].mxu0
      %v359 = vadd.f32 0.0, %v358
      %v360 = vpop.f32.mrb[0].mxu0
      %v361 = vadd.f32 0.0, %v360
      %362 = vmatprep.mubr.f32.mxu0 0.0
      %363 = vmatmul.mubr.f32.gmra.mrb[0].mxu0 %v200
      %v364 = vpop.f32.mrb[0].mxu0
      %v365 = vadd.f32 0.0, %v364
      %v366 = vpop.f32.mrb[0].mxu0
      %v367 = vadd.f32 0.0, %v366
      %368 = vmatprep.mubr.f32.mxu0 0.0
      %369 = vmatmul.mubr.f32.gmra.mrb[0].mxu0 %v203
      %v370 = vpop.f32.mrb[0].mxu0
      %v371 = vadd.f32 0.0, %v370
      %v372 = vpop.f32.mrb[0].mxu0
      %v373 = vadd.f32 0.0, %v372
      %374 = vmatprep.mubr.f32.mxu0 0.0
      %375 = vmatmul.mubr.f32.gmra.mrb[0].mxu0 %v206
      %v376 = vpop.f32.mrb[0].mxu0
      %v377 = vadd.f32 0.0, %v376
      %v378 = vpop.f32.mrb[0].mxu0
      %v379 = vadd.f32 0.0, %v378
      %380 = vmatprep.mubr.f32.mxu0 0.0
      %381 = vmatmul.mubr.f32.gmra.mrb[0].mxu0 %v209
      %v382 = vpop.f32.mrb[0].mxu0
      %v383 = vadd.f32 0.0, %v382
      %v384 = vpop.f32.mrb[0].mxu0
      %v385 = vadd.f32 0.0, %v384
      %386 = vmatprep.mubr.f32.mxu0 0.0
      %387 = vmatmul.mubr.f32.gmra.mrb[0].mxu0 %v212
      %v388 = vpop.f32.mrb[0].mxu0
      %v389 = vadd.f32 0.0, %v388
      %v390 = vpop.f32.mrb[0].mxu0
      %v391 = vadd.f32 0.0, %v390
      %392 = vmatprep.mubr.f32.mxu0 0.0
      %393 = vmatmul.mubr.f32.gmra.mrb[0].mxu0 %v215
      %v394 = vpop.f32.mrb[0].mxu0
      %v395 = vadd.f32 0.0, %v394
      %v396 = vpop.f32.mrb[0].mxu0
      %v397 = vadd.f32 0.0, %v396
      %398 = vmatprep.mubr.f32.mxu0 0.0
      %399 = vmatmul.mubr.f32.gmra.mrb[0].mxu0 %v218
      %v400 = vpop.f32.mrb[0].mxu0
      %v401 = vadd.f32 0.0, %v400
      %v402 = vpop.f32.mrb[0].mxu0
      %v403 = vadd.f32 0.0, %v402
      %404 = vmatprep.mubr.f32.mxu0 0.0
      %405 = vmatmul.mubr.f32.gmra.mrb[0].mxu0 %v221
      %v406 = vpop.f32.mrb[0].mxu0
      %v407 = vadd.f32 0.0, %v406
      %v408 = vpop.f32.mrb[0].mxu0
      %v409 = vadd.f32 0.0, %v408
      %410 = vmatprep.mubr.f32.mxu0 0.0
      %411 = vmatmul.mubr.f32.gmra.mrb[0].mxu0 %v224
      %v412 = vpop.f32.mrb[0].mxu0
      %v413 = vadd.f32 0.0, %v412
      %v414 = vpop.f32.mrb[0].mxu0
      %v415 = vadd.f32 0.0, %v414
      %416 = vmatprep.mubr.f32.mxu0 0.0
      %417 = vmatmul.mubr.f32.gmra.mrb[0].mxu0 %v227
      %v418 = vpop.f32.mrb[0].mxu0
      %v419 = vadd.f32 0.0, %v418
      %v420 = vpop.f32.mrb[0].mxu0
      %v421 = vadd.f32 0.0, %v420
      %422 = vmatprep.mubr.f32.mxu0 0.0
      %423 = vmatmul.mubr.f32.gmra.mrb[0].mxu0 %v230
      %v424 = vpop.f32.mrb[0].mxu0
      %v425 = vadd.f32 0.0, %v424
      %v426 = vpop.f32.mrb[0].mxu0
      %v427 = vadd.f32 0.0, %v426
      %428 = vmatprep.mubr.f32.mxu0 0.0
      %429 = vmatmul.mubr.f32.gmra.mrb[0].mxu0 %v233
      %v430 = vpop.f32.mrb[0].mxu0
      %v431 = vadd.f32 0.0, %v430
      %v432 = vpop.f32.mrb[0].mxu0
      %v433 = vadd.f32 0.0, %v432
      %434 = vmatprep.mubr.f32.mxu0 0.0
      %435 = vmatmul.mubr.f32.gmra.mrb[0].mxu0 %v236
      %v436 = vpop.f32.mrb[0].mxu0
      %v437 = vadd.f32 0.0, %v436
      %v438 = vpop.f32.mrb[0].mxu0
      %v439 = vadd.f32 0.0, %v438
      %440 = vmatprep.mubr.f32.mxu0 0.0
      %441 = vmatmul.mubr.f32.gmra.mrb[0].mxu0 %v239
      %v442 = vpop.f32.mrb[0].mxu0
      %v443 = vadd.f32 0.0, %v442
      %v444 = vpop.f32.mrb[0].mxu0
      %v445 = vadd.f32 0.0, %v444
      %446 = vmatprep.mubr.f32.mxu0 0.0
      %447 = vmatmul.mubr.f32.gmra.mrb[0].mxu0 %v242
      %v448 = vpop.f32.mrb[0].mxu0
      %v449 = vadd.f32 0.0, %v448
      %v450 = vpop.f32.mrb[0].mxu0
      %v451 = vadd.f32 0.0, %v450
      %452 = vmatprep.mubr.f32.mxu0 0.0
      %453 = vmatmul.mubr.f32.gmra.mrb[0].mxu0 %v245
      %v454 = vpop.f32.mrb[0].mxu0
      %v455 = vadd.f32 0.0, %v454
      %v456 = vpop.f32.mrb[0].mxu0
      %v457 = vadd.f32 0.0, %v456
      %458 = vmatprep.mubr.f32.mxu0 0.0
      %459 = vmatmul.mubr.f32.gmra.mrb[0].mxu0 %v248
      %v460 = vpop.f32.mrb[0].mxu0
      %v461 = vadd.f32 0.0, %v460
      %v462 = vpop.f32.mrb[0].mxu0
      %v463 = vadd.f32 0.0, %v462
      %464 = vmatprep.mubr.f32.mxu0 0.0
      %465 = vmatmul.mubr.f32.gmra.mrb[0].mxu0 %v251
      %v466 = vpop.f32.mrb[0].mxu0
      %v467 = vadd.f32 0.0, %v466
      %v468 = vpop.f32.mrb[0].mxu0
      %v469 = vadd.f32 0.0, %v468
      %470 = vmatprep.mubr.f32.mxu0 0.0
      %471 = vmatmul.mubr.f32.gmra.mrb[0].mxu0 %v254
      %v472 = vpop.f32.mrb[0].mxu0
      %v473 = vadd.f32 0.0, %v472
      %v474 = vpop.f32.mrb[0].mxu0
      %v475 = vadd.f32 0.0, %v474
      %476 = vmatprep.mubr.f32.mxu0 0.0
      %477 = vmatmul.mubr.f32.gmra.mrb[0].mxu0 %v257
      %v478 = vpop.f32.mrb[0].mxu0
      %v479 = vadd.f32 0.0, %v478
      %v480 = vpop.f32.mrb[0].mxu0
      %v481 = vadd.f32 0.0, %v480
      %482 = vmatprep.mubr.f32.mxu0 0.0
      %483 = vmatmul.mubr.f32.gmra.mrb[0].mxu0 %v260
      %v484 = vpop.f32.mrb[0].mxu0
      %v485 = vadd.f32 0.0, %v484
      %v486 = vpop.f32.mrb[0].mxu0
      %v487 = vadd.f32 0.0, %v486
      %488 = vmatprep.mubr.f32.mxu0 0.0
      %489 = vmatmul.mubr.f32.gmra.mrb[0].mxu0 %v263
      %v490 = vpop.f32.mrb[0].mxu0
      %v491 = vadd.f32 0.0, %v490
      %v492 = vpop.f32.mrb[0].mxu0
      %v493 = vadd.f32 0.0, %v492
      %494 = vmatprep.mubr.f32.mxu0 0.0
      %495 = vmatmul.mubr.f32.gmra.mrb[0].mxu0 %v266
      %v496 = vpop.f32.mrb[0].mxu0
      %v497 = vadd.f32 0.0, %v496
      %v498 = vpop.f32.mrb[0].mxu0
      %v499 = vadd.f32 0.0, %v498
      %500 = vmatprep.mubr.f32.mxu0 0.0
      %501 = vmatmul.mubr.f32.gmra.mrb[0].mxu0 %v269
      %v502 = vpop.f32.mrb[0].mxu0
      %v503 = vadd.f32 0.0, %v502
      %v504 = vpop.f32.mrb[0].mxu0
      %v505 = vadd.f32 0.0, %v504
      %506 = vmatprep.mubr.f32.mxu0 0.0
      %507 = vmatmul.mubr.f32.gmra.mrb[0].mxu0 %v272
      %v508 = vpop.f32.mrb[0].mxu0
      %v509 = vadd.f32 0.0, %v508
      %v510 = vpop.f32.mrb[0].mxu0
      %v511 = vadd.f32 0.0, %v510
      %512 = vmatprep.mubr.f32.mxu0 0.0
      %513 = vmatmul.mubr.f32.gmra.mrb[0].mxu0 %v275
      %v514 = vpop.f32.mrb[0].mxu0
      %v515 = vadd.f32 0.0, %v514
      %v516 = vpop.f32.mrb[0].mxu0
      %v517 = vadd.f32 0.0, %v516
      %518 = vmatprep.mubr.f32.mxu0 0.0
      %519 = vmatmul.mubr.f32.gmra.mrb[0].mxu0 %v278
      %v520 = vpop.f32.mrb[0].mxu0
      %v521 = vadd.f32 0.0, %v520
      %v522 = vpop.f32.mrb[0].mxu0
      %v523 = vadd.f32 0.0, %v522
      %524 = vmatprep.mubr.f32.mxu0 0.0
      %525 = vmatmul.mubr.f32.gmra.mrb[0].mxu0 %v281
      %v526 = vpop.f32.mrb[0].mxu0
      %v527 = vadd.f32 0.0, %v526
      %v528 = vpop.f32.mrb[0].mxu0
      %v529 = vadd.f32 0.0, %v528
      %530 = vmatprep.mubr.f32.mxu0 0.0
      %531 = vmatmul.mubr.f32.gmra.mrb[0].mxu0 %v284
      %v532 = vpop.f32.mrb[0].mxu0
      %v533 = vadd.f32 0.0, %v532
      %v534 = vpop.f32.mrb[0].mxu0
      %v535 = vadd.f32 0.0, %v534
      %536 = vmatprep.mubr.f32.mxu0 0.0
      %537 = vmatmul.mubr.f32.gmra.mrb[0].mxu0 %v287
      %v538 = vpop.f32.mrb[0].mxu0
      %v539 = vadd.f32 0.0, %v538
      %v540 = vpop.f32.mrb[0].mxu0
      %v541 = vadd.f32 0.0, %v540
      %542 = vmatprep.mubr.f32.mxu0 0.0
      %543 = vmatmul.mubr.f32.gmra.mrb[0].mxu0 %v290
      %v544 = vpop.f32.mrb[0].mxu0
      %v545 = vadd.f32 0.0, %v544
      %v546 = vpop.f32.mrb[0].mxu0
      %v547 = vadd.f32 0.0, %v546
      %548 = vdwg.mxu0
      %v549 = vmul.f32 %v359, %v359
      %v550 = vmul.f32 %v365, %v365
      %v551 = vmul.f32 %v371, %v371
      %v552 = vmul.f32 %v377, %v377
      %v553 = vmul.f32 %v383, %v383
      %v554 = vmul.f32 %v389, %v389
      %v555 = vmul.f32 %v395, %v395
      %v556 = vmul.f32 %v401, %v401
      %v557 = vmul.f32 %v407, %v407
      %v558 = vmul.f32 %v413, %v413
      %v559 = vmul.f32 %v419, %v419
      %v560 = vmul.f32 %v425, %v425
      %v561 = vmul.f32 %v431, %v431
      %v562 = vmul.f32 %v437, %v437
      %v563 = vmul.f32 %v443, %v443
      %v564 = vmul.f32 %v449, %v449
      %v565 = vmul.f32 %v455, %v455
      %v566 = vmul.f32 %v461, %v461
      %v567 = vmul.f32 %v467, %v467
      %v568 = vmul.f32 %v473, %v473
      %v569 = vmul.f32 %v479, %v479
      %v570 = vmul.f32 %v485, %v485
      %v571 = vmul.f32 %v491, %v491
      %v572 = vmul.f32 %v497, %v497
      %v573 = vmul.f32 %v503, %v503
      %v574 = vmul.f32 %v509, %v509
      %v575 = vmul.f32 %v515, %v515
      %v576 = vmul.f32 %v521, %v521
      %v577 = vmul.f32 %v527, %v527
      %v578 = vmul.f32 %v533, %v533
      %v579 = vmul.f32 %v539, %v539
      %v580 = vmul.f32 %v545, %v545
      %v581 = vmul.f32 %v361, %v361
      %v582 = vmul.f32 %v367, %v367
      %v583 = vmul.f32 %v373, %v373
      %v584 = vmul.f32 %v379, %v379
      %v585 = vmul.f32 %v385, %v385
      %v586 = vmul.f32 %v391, %v391
      %v587 = vmul.f32 %v397, %v397
      %v588 = vmul.f32 %v403, %v403
      %v589 = vmul.f32 %v409, %v409
      %v590 = vmul.f32 %v415, %v415
      %v591 = vmul.f32 %v421, %v421
      %v592 = vmul.f32 %v427, %v427
      %v593 = vmul.f32 %v433, %v433
      %v594 = vmul.f32 %v439, %v439
      %v595 = vmul.f32 %v445, %v445
      %v596 = vmul.f32 %v451, %v451
      %v597 = vmul.f32 %v457, %v457
      %v598 = vmul.f32 %v463, %v463
      %v599 = vmul.f32 %v469, %v469
      %v600 = vmul.f32 %v475, %v475
      %v601 = vmul.f32 %v481, %v481
      %v602 = vmul.f32 %v487, %v487
      %v603 = vmul.f32 %v493, %v493
      %v604 = vmul.f32 %v499, %v499
      %v605 = vmul.f32 %v505, %v505
      %v606 = vmul.f32 %v511, %v511
      %v607 = vmul.f32 %v517, %v517
      %v608 = vmul.f32 %v523, %v523
      %v609 = vmul.f32 %v529, %v529
      %v610 = vmul.f32 %v535, %v535
      %v611 = vmul.f32 %v541, %v541
      %v612 = vmul.f32 %v547, %v547
      %v613 = vadd.f32 %v549, %v581
      %v614 = vadd.f32 %v550, %v582
      %v615 = vadd.f32 %v551, %v583
      %v616 = vadd.f32 %v552, %v584
      %v617 = vadd.f32 %v553, %v585
      %v618 = vadd.f32 %v554, %v586
      %v619 = vadd.f32 %v555, %v587
      %v620 = vadd.f32 %v556, %v588
      %v621 = vadd.f32 %v557, %v589
      %v622 = vadd.f32 %v558, %v590
      %v623 = vadd.f32 %v559, %v591
      %v624 = vadd.f32 %v560, %v592
      %v625 = vadd.f32 %v561, %v593
      %v626 = vadd.f32 %v562, %v594
      %v627 = vadd.f32 %v563, %v595
      %v628 = vadd.f32 %v564, %v596
      %v629 = vadd.f32 %v565, %v597
      %v630 = vadd.f32 %v566, %v598
      %v631 = vadd.f32 %v567, %v599
      %v632 = vadd.f32 %v568, %v600
      %v633 = vadd.f32 %v569, %v601
      %v634 = vadd.f32 %v570, %v602
      %v635 = vadd.f32 %v571, %v603
      %v636 = vadd.f32 %v572, %v604
      %v637 = vadd.f32 %v573, %v605
      %v638 = vadd.f32 %v574, %v606
      %v639 = vadd.f32 %v575, %v607
      %v640 = vadd.f32 %v576, %v608
      %v641 = vadd.f32 %v577, %v609
      %v642 = vadd.f32 %v578, %v610
      %v643 = vadd.f32 %v579, %v611
      %v644 = vadd.f32 %v580, %v612
      %v645 = vadd.f32 %v613, 1e-08
      %v646 = vadd.f32 %v614, 1e-08
      %v647 = vadd.f32 %v615, 1e-08
      %v648 = vadd.f32 %v616, 1e-08
      %v649 = vadd.f32 %v617, 1e-08
      %v650 = vadd.f32 %v618, 1e-08
      %v651 = vadd.f32 %v619, 1e-08
      %v652 = vadd.f32 %v620, 1e-08
      %v653 = vadd.f32 %v621, 1e-08
      %v654 = vadd.f32 %v622, 1e-08
      %v655 = vadd.f32 %v623, 1e-08
      %v656 = vadd.f32 %v624, 1e-08
      %v657 = vadd.f32 %v625, 1e-08
      %v658 = vadd.f32 %v626, 1e-08
      %v659 = vadd.f32 %v627, 1e-08
      %v660 = vadd.f32 %v628, 1e-08
      %v661 = vadd.f32 %v629, 1e-08
      %v662 = vadd.f32 %v630, 1e-08
      %v663 = vadd.f32 %v631, 1e-08
      %v664 = vadd.f32 %v632, 1e-08
      %v665 = vadd.f32 %v633, 1e-08
      %v666 = vadd.f32 %v634, 1e-08
      %v667 = vadd.f32 %v635, 1e-08
      %v668 = vadd.f32 %v636, 1e-08
      %v669 = vadd.f32 %v637, 1e-08
      %v670 = vadd.f32 %v638, 1e-08
      %v671 = vadd.f32 %v639, 1e-08
      %v672 = vadd.f32 %v640, 1e-08
      %v673 = vadd.f32 %v641, 1e-08
      %v674 = vadd.f32 %v642, 1e-08
      %v675 = vadd.f32 %v643, 1e-08
      %v676 = vadd.f32 %v644, 1e-08
      %v677 = vrsqrt.pop %v645
      %v678 = vmul.f32 %v645, %v677
      %vm679 = vcmp.eq.f32.partialorder %v645, inf
      %v680 = vsel %vm679, %v645, %v678
      %vm681 = vcmp.eq.f32.partialorder %v645, 0.0
      %v682 = vand.u32 %v645, 2147483648
      %v683 = vsel %vm681, %v682, %v680
      %v684 = vrsqrt.pop %v646
      %v685 = vmul.f32 %v646, %v684
      %vm686 = vcmp.eq.f32.partialorder %v646, inf
      %v687 = vsel %vm686, %v646, %v685
      %vm688 = vcmp.eq.f32.partialorder %v646, 0.0
      %v689 = vand.u32 %v646, 2147483648
      %v690 = vsel %vm688, %v689, %v687
      %v691 = vrsqrt.pop %v647
      %v692 = vmul.f32 %v647, %v691
      %vm693 = vcmp.eq.f32.partialorder %v647, inf
      %v694 = vsel %vm693, %v647, %v692
      %vm695 = vcmp.eq.f32.partialorder %v647, 0.0
      %v696 = vand.u32 %v647, 2147483648
      %v697 = vsel %vm695, %v696, %v694
      %v698 = vrsqrt.pop %v648
      %v699 = vmul.f32 %v648, %v698
      %vm700 = vcmp.eq.f32.partialorder %v648, inf
      %v701 = vsel %vm700, %v648, %v699
      %vm702 = vcmp.eq.f32.partialorder %v648, 0.0
      %v703 = vand.u32 %v648, 2147483648
      %v704 = vsel %vm702, %v703, %v701
      %v705 = vrsqrt.pop %v649
      %v706 = vmul.f32 %v649, %v705
      %vm707 = vcmp.eq.f32.partialorder %v649, inf
      %v708 = vsel %vm707, %v649, %v706
      %vm709 = vcmp.eq.f32.partialorder %v649, 0.0
      %v710 = vand.u32 %v649, 2147483648
      %v711 = vsel %vm709, %v710, %v708
      %v712 = vrsqrt.pop %v650
      %v713 = vmul.f32 %v650, %v712
      %vm714 = vcmp.eq.f32.partialorder %v650, inf
      %v715 = vsel %vm714, %v650, %v713
      %vm716 = vcmp.eq.f32.partialorder %v650, 0.0
      %v717 = vand.u32 %v650, 2147483648
      %v718 = vsel %vm716, %v717, %v715
      %v719 = vrsqrt.pop %v651
      %v720 = vmul.f32 %v651, %v719
      %vm721 = vcmp.eq.f32.partialorder %v651, inf
      %v722 = vsel %vm721, %v651, %v720
      %vm723 = vcmp.eq.f32.partialorder %v651, 0.0
      %v724 = vand.u32 %v651, 2147483648
      %v725 = vsel %vm723, %v724, %v722
      %v726 = vrsqrt.pop %v652
      %v727 = vmul.f32 %v652, %v726
      %vm728 = vcmp.eq.f32.partialorder %v652, inf
      %v729 = vsel %vm728, %v652, %v727
      %vm730 = vcmp.eq.f32.partialorder %v652, 0.0
      %v731 = vand.u32 %v652, 2147483648
      %v732 = vsel %vm730, %v731, %v729
      %v733 = vrsqrt.pop %v653
      %v734 = vmul.f32 %v653, %v733
      %vm735 = vcmp.eq.f32.partialorder %v653, inf
      %v736 = vsel %vm735, %v653, %v734
      %vm737 = vcmp.eq.f32.partialorder %v653, 0.0
      %v738 = vand.u32 %v653, 2147483648
      %v739 = vsel %vm737, %v738, %v736
      %v740 = vrsqrt.pop %v654
      %v741 = vmul.f32 %v654, %v740
      %vm742 = vcmp.eq.f32.partialorder %v654, inf
      %v743 = vsel %vm742, %v654, %v741
      %vm744 = vcmp.eq.f32.partialorder %v654, 0.0
      %v745 = vand.u32 %v654, 2147483648
      %v746 = vsel %vm744, %v745, %v743
      %v747 = vrsqrt.pop %v655
      %v748 = vmul.f32 %v655, %v747
      %vm749 = vcmp.eq.f32.partialorder %v655, inf
      %v750 = vsel %vm749, %v655, %v748
      %vm751 = vcmp.eq.f32.partialorder %v655, 0.0
      %v752 = vand.u32 %v655, 2147483648
      %v753 = vsel %vm751, %v752, %v750
      %v754 = vrsqrt.pop %v656
      %v755 = vmul.f32 %v656, %v754
      %vm756 = vcmp.eq.f32.partialorder %v656, inf
      %v757 = vsel %vm756, %v656, %v755
      %vm758 = vcmp.eq.f32.partialorder %v656, 0.0
      %v759 = vand.u32 %v656, 2147483648
      %v760 = vsel %vm758, %v759, %v757
      %v761 = vrsqrt.pop %v657
      %v762 = vmul.f32 %v657, %v761
      %vm763 = vcmp.eq.f32.partialorder %v657, inf
      %v764 = vsel %vm763, %v657, %v762
      %vm765 = vcmp.eq.f32.partialorder %v657, 0.0
      %v766 = vand.u32 %v657, 2147483648
      %v767 = vsel %vm765, %v766, %v764
      %v768 = vrsqrt.pop %v658
      %v769 = vmul.f32 %v658, %v768
      %vm770 = vcmp.eq.f32.partialorder %v658, inf
      %v771 = vsel %vm770, %v658, %v769
      %vm772 = vcmp.eq.f32.partialorder %v658, 0.0
      %v773 = vand.u32 %v658, 2147483648
      %v774 = vsel %vm772, %v773, %v771
      %v775 = vrsqrt.pop %v659
      %v776 = vmul.f32 %v659, %v775
      %vm777 = vcmp.eq.f32.partialorder %v659, inf
      %v778 = vsel %vm777, %v659, %v776
      %vm779 = vcmp.eq.f32.partialorder %v659, 0.0
      %v780 = vand.u32 %v659, 2147483648
      %v781 = vsel %vm779, %v780, %v778
      %v782 = vrsqrt.pop %v660
      %v783 = vmul.f32 %v660, %v782
      %vm784 = vcmp.eq.f32.partialorder %v660, inf
      %v785 = vsel %vm784, %v660, %v783
      %vm786 = vcmp.eq.f32.partialorder %v660, 0.0
      %v787 = vand.u32 %v660, 2147483648
      %v788 = vsel %vm786, %v787, %v785
      %v789 = vrsqrt.pop %v661
      %v790 = vmul.f32 %v661, %v789
      %vm791 = vcmp.eq.f32.partialorder %v661, inf
      %v792 = vsel %vm791, %v661, %v790
      %vm793 = vcmp.eq.f32.partialorder %v661, 0.0
      %v794 = vand.u32 %v661, 2147483648
      %v795 = vsel %vm793, %v794, %v792
      %v796 = vrsqrt.pop %v662
      %v797 = vmul.f32 %v662, %v796
      %vm798 = vcmp.eq.f32.partialorder %v662, inf
      %v799 = vsel %vm798, %v662, %v797
      %vm800 = vcmp.eq.f32.partialorder %v662, 0.0
      %v801 = vand.u32 %v662, 2147483648
      %v802 = vsel %vm800, %v801, %v799
      %v803 = vrsqrt.pop %v663
      %v804 = vmul.f32 %v663, %v803
      %vm805 = vcmp.eq.f32.partialorder %v663, inf
      %v806 = vsel %vm805, %v663, %v804
      %vm807 = vcmp.eq.f32.partialorder %v663, 0.0
      %v808 = vand.u32 %v663, 2147483648
      %v809 = vsel %vm807, %v808, %v806
      %v810 = vrsqrt.pop %v664
      %v811 = vmul.f32 %v664, %v810
      %vm812 = vcmp.eq.f32.partialorder %v664, inf
      %v813 = vsel %vm812, %v664, %v811
      %vm814 = vcmp.eq.f32.partialorder %v664, 0.0
      %v815 = vand.u32 %v664, 2147483648
      %v816 = vsel %vm814, %v815, %v813
      %v817 = vrsqrt.pop %v665
      %v818 = vmul.f32 %v665, %v817
      %vm819 = vcmp.eq.f32.partialorder %v665, inf
      %v820 = vsel %vm819, %v665, %v818
      %vm821 = vcmp.eq.f32.partialorder %v665, 0.0
      %v822 = vand.u32 %v665, 2147483648
      %v823 = vsel %vm821, %v822, %v820
      %v824 = vrsqrt.pop %v666
      %v825 = vmul.f32 %v666, %v824
      %vm826 = vcmp.eq.f32.partialorder %v666, inf
      %v827 = vsel %vm826, %v666, %v825
      %vm828 = vcmp.eq.f32.partialorder %v666, 0.0
      %v829 = vand.u32 %v666, 2147483648
      %v830 = vsel %vm828, %v829, %v827
      %v831 = vrsqrt.pop %v667
      %v832 = vmul.f32 %v667, %v831
      %vm833 = vcmp.eq.f32.partialorder %v667, inf
      %v834 = vsel %vm833, %v667, %v832
      %vm835 = vcmp.eq.f32.partialorder %v667, 0.0
      %v836 = vand.u32 %v667, 2147483648
      %v837 = vsel %vm835, %v836, %v834
      %v838 = vrsqrt.pop %v668
      %v839 = vmul.f32 %v668, %v838
      %vm840 = vcmp.eq.f32.partialorder %v668, inf
      %v841 = vsel %vm840, %v668, %v839
      %vm842 = vcmp.eq.f32.partialorder %v668, 0.0
      %v843 = vand.u32 %v668, 2147483648
      %v844 = vsel %vm842, %v843, %v841
      %v845 = vrsqrt.pop %v669
      %v846 = vmul.f32 %v669, %v845
      %vm847 = vcmp.eq.f32.partialorder %v669, inf
      %v848 = vsel %vm847, %v669, %v846
      %vm849 = vcmp.eq.f32.partialorder %v669, 0.0
      %v850 = vand.u32 %v669, 2147483648
      %v851 = vsel %vm849, %v850, %v848
      %v852 = vrsqrt.pop %v670
      %v853 = vmul.f32 %v670, %v852
      %vm854 = vcmp.eq.f32.partialorder %v670, inf
      %v855 = vsel %vm854, %v670, %v853
      %vm856 = vcmp.eq.f32.partialorder %v670, 0.0
      %v857 = vand.u32 %v670, 2147483648
      %v858 = vsel %vm856, %v857, %v855
      %v859 = vrsqrt.pop %v671
      %v860 = vmul.f32 %v671, %v859
      %vm861 = vcmp.eq.f32.partialorder %v671, inf
      %v862 = vsel %vm861, %v671, %v860
      %vm863 = vcmp.eq.f32.partialorder %v671, 0.0
      %v864 = vand.u32 %v671, 2147483648
      %v865 = vsel %vm863, %v864, %v862
      %v866 = vrsqrt.pop %v672
      %v867 = vmul.f32 %v672, %v866
      %vm868 = vcmp.eq.f32.partialorder %v672, inf
      %v869 = vsel %vm868, %v672, %v867
      %vm870 = vcmp.eq.f32.partialorder %v672, 0.0
      %v871 = vand.u32 %v672, 2147483648
      %v872 = vsel %vm870, %v871, %v869
      %v873 = vrsqrt.pop %v673
      %v874 = vmul.f32 %v673, %v873
      %vm875 = vcmp.eq.f32.partialorder %v673, inf
      %v876 = vsel %vm875, %v673, %v874
      %vm877 = vcmp.eq.f32.partialorder %v673, 0.0
      %v878 = vand.u32 %v673, 2147483648
      %v879 = vsel %vm877, %v878, %v876
      %v880 = vrsqrt.pop %v674
      %v881 = vmul.f32 %v674, %v880
      %vm882 = vcmp.eq.f32.partialorder %v674, inf
      %v883 = vsel %vm882, %v674, %v881
      %vm884 = vcmp.eq.f32.partialorder %v674, 0.0
      %v885 = vand.u32 %v674, 2147483648
      %v886 = vsel %vm884, %v885, %v883
      %v887 = vrsqrt.pop %v675
      %v888 = vmul.f32 %v675, %v887
      %vm889 = vcmp.eq.f32.partialorder %v675, inf
      %v890 = vsel %vm889, %v675, %v888
      %vm891 = vcmp.eq.f32.partialorder %v675, 0.0
      %v892 = vand.u32 %v675, 2147483648
      %v893 = vsel %vm891, %v892, %v890
      %v894 = vrsqrt.pop %v676
      %v895 = vmul.f32 %v676, %v894
      %vm896 = vcmp.eq.f32.partialorder %v676, inf
      %v897 = vsel %vm896, %v676, %v895
      %vm898 = vcmp.eq.f32.partialorder %v676, 0.0
      %v899 = vand.u32 %v676, 2147483648
      %v900 = vsel %vm898, %v899, %v897
      %901 = vst [vmem:[%s145] sm:$0xff] %v683
      %902 = vst [vmem:[%s145 + $0x8] sm:$0xff] %v690
      %903 = vst [vmem:[%s145 + $0x10] sm:$0xff] %v697
      %904 = vst [vmem:[%s145 + $0x18] sm:$0xff] %v704
      %905 = vst [vmem:[%s145 + $0x20] sm:$0xff] %v711
      %906 = vst [vmem:[%s145 + $0x28] sm:$0xff] %v718
      %907 = vst [vmem:[%s145 + $0x30] sm:$0xff] %v725
      %908 = vst [vmem:[%s145 + $0x38] sm:$0xff] %v732
      %909 = vst [vmem:[%s145 + $0x40] sm:$0xff] %v739
      %910 = vst [vmem:[%s145 + $0x48] sm:$0xff] %v746
      %911 = vst [vmem:[%s145 + $0x50] sm:$0xff] %v753
      %912 = vst [vmem:[%s145 + $0x58] sm:$0xff] %v760
      %913 = vst [vmem:[%s145 + $0x60] sm:$0xff] %v767
      %914 = vst [vmem:[%s145 + $0x68] sm:$0xff] %v774
      %915 = vst [vmem:[%s145 + $0x70] sm:$0xff] %v781
      %916 = vst [vmem:[%s145 + $0x78] sm:$0xff] %v788
      %917 = vst [vmem:[%s145 + $0x80] sm:$0xff] %v795
      %918 = vst [vmem:[%s145 + $0x88] sm:$0xff] %v802
      %919 = vst [vmem:[%s145 + $0x90] sm:$0xff] %v809
      %920 = vst [vmem:[%s145 + $0x98] sm:$0xff] %v816
      %921 = vst [vmem:[%s145 + $0xa0] sm:$0xff] %v823
      %922 = vst [vmem:[%s145 + $0xa8] sm:$0xff] %v830
      %923 = vst [vmem:[%s145 + $0xb0] sm:$0xff] %v837
      %924 = vst [vmem:[%s145 + $0xb8] sm:$0xff] %v844
      %925 = vst [vmem:[%s145 + $0xc0] sm:$0xff] %v851
      %926 = vst [vmem:[%s145 + $0xc8] sm:$0xff] %v858
      %927 = vst [vmem:[%s145 + $0xd0] sm:$0xff] %v865
      %928 = vst [vmem:[%s145 + $0xd8] sm:$0xff] %v872
      %929 = vst [vmem:[%s145 + $0xe0] sm:$0xff] %v879
      %930 = vst [vmem:[%s145 + $0xe8] sm:$0xff] %v886
      %931 = vst [vmem:[%s145 + $0xf0] sm:$0xff] %v893
      %932 = vst [vmem:[%s145 + $0xf8] sm:$0xff] %v900
      %s933 = smul.u32 32, %s13
      %p934 = scmp.lt.s32.totalorder %s933, 63
      %s935 = scalar_select %p934, %s933, 63
      %s936 = smul.addr %s935, 8
      %s937 = scalar_lea.vmem %s2, %s936
      // Predicated region
      $region29: #{stft_layer.1} parent=27 // pred_check
        %p938 = pneg %p78
      $region30: #{stft_layer.1} parent=27 // pred_check_branch
        %940 = sbr.rel (%p938) target = $region32
      $region31: #{stft_layer.1} parent=27 // pred_region
        %s941 = smul.u32 32, %s13
      $region32: #{stft_layer.1} parent=27 // pred_fallthru
        _
    $region28: #{stft_layer.1} parent=5 // pred_fallthru
      _
    %p942 = scmp.le.s32.totalorder 2, %s8
    // Predicated region
    $region33: #{stft_layer.1} parent=5 // pred_check
      %p943 = pneg %p942
    $region34: #{stft_layer.1} parent=5 // pred_check_branch
      %945 = sbr.rel (%p943) target = $region36
    $region35: #{stft_layer.1} parent=5 // pred_region
      %s946 = ssub.s32 %s8, 2
      // Predicated region
      $region37: #{stft_layer.1} parent=35 // pred_check
        %p947 = pneg %p84
      $region38: #{stft_layer.1} parent=35 // pred_check_branch
        %949 = sbr.rel (%p947) target = $region40
      $region39: #{stft_layer.1} parent=35 // pred_region
        %s950 = smul.u32 32, %s14
        %p951 = scmp.lt.s32.totalorder %s950, 63
        %s952 = scalar_select %p951, %s950, 63
        %s953 = smul.addr %s952, 8
        %s954 = scalar_lea.vmem %s2, %s953
      $region40: #{stft_layer.1} parent=35 // pred_fallthru
        _
    $region36: #{stft_layer.1} parent=5 // pred_fallthru
      _
  $region6: #{stft_layer.1} parent=0 // loop_footer
    %s12 = sadd.s32 1, %s8
  $region7: #{stft_layer.1} parent=0 // loop_footer_branch
    %7 = sbr.rel target = $region3
  $region8: #{stft_layer.1} parent=0 // loop_exit
    _

</llo_original>
